<compile_context>
chip_gen: v6e
topology: v6e:2x2x1
jax: 0.10.0
libtpu: 0.0.40
codegen_flags: <defaults>
</compile_context>

<pallas_src>
import jax
import jax.numpy as jnp
import numpy as np
from jax.experimental import pallas as pl
from jax.experimental.pallas import tpu as pltpu


# ----------------------------------------------------------------------------
# VMEM planning
# ----------------------------------------------------------------------------
def _vmem_capacity_bytes():
    try:
        return int(pltpu.get_tpu_info().vmem_capacity_bytes)
    except Exception:
        return 64 * 1024 * 1024          # conservative: v7x per-TC VMEM


def _vmem_plan():
    cap = _vmem_capacity_bytes()
    # 25% headroom for compiler scratch / semaphores, capped at 96 MiB.
    # v5e/v6e (128 MiB physical) -> 96 MiB limit; v7x (64 MiB) -> 48 MiB.
    vmem_limit = min(cap * 3 // 4, 96 * 1024 * 1024)
    tile_budget = max(vmem_limit - 8 * 1024 * 1024, 8 * 1024 * 1024)
    return int(vmem_limit), int(tile_budget)


def _pick_tile_n(S, N, D, H, in_itemsize, out_itemsize, budget_bytes,
                 max_tile=2048):
    """Largest multiple of 8 dividing N whose resident bytes fit the budget."""
    assert N % 8 == 0, "N must be a multiple of 8 (pad users in the wrapper)"
    bytes_per_n = (2 * S * D * in_itemsize      # double-buffered input block
                   + 2 * D * out_itemsize       # double-buffered output block
                   + (2 * D + H + 4 * S) * 4)   # in-kernel f32 temporaries
    cap = max(8, budget_bytes // bytes_per_n)
    cap = min(cap, max_tile, N)
    if N >= 16:
        cap = min(cap, N // 2)   # >= 2 grid steps: both v7x TCs get work
    tile = max(8, (cap // 8) * 8)
    while tile > 8 and N % tile != 0:
        tile -= 8
    return tile


# ----------------------------------------------------------------------------
# part_type == 3 kernel: score MLP -> softmax over slices -> weighted sum
# ----------------------------------------------------------------------------
def _agg_score_kernel(e_ref, w1_ref, b1_ref, w2r_ref, out_ref):
    S = e_ref.shape[0]
    # bf16 MXU operands when embeds are already sub-4-byte (prod); exact f32
    # otherwise.  S is small, so static unrolled loops are fine.
    mm_dtype = jnp.bfloat16 if jnp.dtype(e_ref.dtype).itemsize < 4 else jnp.float32
    w1 = w1_ref[...].astype(mm_dtype)
    b1 = b1_ref[...]                      # (1, H) f32
    w2r = w2r_ref[...]                    # (1, H) f32

    # Pass 1: per-slice attention scores (f32 accumulation, as in embeds.float()).
    scores = []
    for s in range(S):
        h = jnp.dot(e_ref[s].astype(mm_dtype), w1,
                    preferred_element_type=jnp.float32)        # (tn, H)
        h = jnp.maximum(h + b1, 0.0)
        # Linear(H, 1): VPU multiply + XLU cross-lane reduce, no width-1 MXU pop.
        scores.append(jnp.sum(h * w2r, axis=-1, keepdims=True))  # (tn, 1) f32

    # Softmax over the slice axis (PyTorch dim=0).  b2 shifts every slice score
    # uniformly and is cancelled by the softmax, so it is not applied.
    m = scores[0]
    for s in range(1, S):
        m = jnp.maximum(m, scores[s])
    exps = [jnp.exp(sc - m) for sc in scores]
    denom = exps[0]
    for s in range(1, S):
        denom = denom + exps[s]
    inv = pl.reciprocal(denom, approx=False)   # exact; hidden under the DMA

    # Pass 2: weighted sum over slices, accumulated slice-by-slice in f32 so the
    # full (S, tn, D) weighted product is never materialized.
    acc = (exps[0] * inv) * e_ref[0].astype(jnp.float32)
    for s in range(1, S):
        acc = acc + (exps[s] * inv) * e_ref[s].astype(jnp.float32)
    out_ref[...] = acc.astype(out_ref.dtype)


def user_aggregator_part3(embeds, w1, b1, w2, b2=None, *, tile_n=None,
                          out_dtype=jnp.float32):
    """embeds: (S, N, D) any float dtype; w1: (D, H); b1: (1, H); w2: (H, 1).

    b2 is accepted for API parity but is mathematically a no-op under the
    slice-axis softmax and is not used.  out_dtype defaults to f32 (torch
    promotion of f32 weights * embeds); pass bf16 to halve writeback bytes.
    """
    del b2
    S, N, D = embeds.shape
    H = w1.shape[1]
    vmem_limit, budget = _vmem_plan()
    if tile_n is None:
        tile_n = _pick_tile_n(S, N, D, H,
                              jnp.dtype(embeds.dtype).itemsize,
                              jnp.dtype(out_dtype).itemsize, budget)
    assert N % tile_n == 0 and tile_n % 8 == 0

    w1_f = w1.astype(jnp.float32)
    b1_f = jnp.reshape(b1, (1, H)).astype(jnp.float32)
    w2_row = jnp.reshape(w2, (1, H)).astype(jnp.float32)   # lane-dense row

    return pl.pallas_call(
        _agg_score_kernel,
        out_shape=jax.ShapeDtypeStruct((N, D), out_dtype),
        grid_spec=pltpu.PrefetchScalarGridSpec(
            num_scalar_prefetch=0,
            grid=(N // tile_n,),
            in_specs=[
                pl.BlockSpec((S, tile_n, D), lambda i: (0, i, 0)),  # embeds (native dtype)
                pl.BlockSpec((D, H), lambda i: (0, 0)),             # W1 (full)
                pl.BlockSpec((1, H), lambda i: (0, 0)),             # b1 (full)
                pl.BlockSpec((1, H), lambda i: (0, 0)),             # W2 as row
            ],
            out_specs=pl.BlockSpec((tile_n, D), lambda i: (i, 0)),
        ),
        compiler_params=pltpu.CompilerParams(
            dimension_semantics=("parallel",),
            vmem_limit_bytes=vmem_limit),
    )(embeds, w1_f, b1_f, w2_row)


# ----------------------------------------------------------------------------
# part_type == 1 kernel: mean over slice axis (f32 accumulation)
# ----------------------------------------------------------------------------
def _agg_mean_kernel(e_ref, out_ref):
    S = e_ref.shape[0]
    acc = e_ref[0].astype(jnp.float32)
    for s in range(1, S):
        acc = acc + e_ref[s].astype(jnp.float32)
    out_ref[...] = (acc * (1.0 / S)).astype(out_ref.dtype)


def user_aggregator_part1(embeds, *, tile_n=None):
    S, N, D = embeds.shape
    vmem_limit, budget = _vmem_plan()
    if tile_n is None:
        tile_n = _pick_tile_n(S, N, D, 0,
                              jnp.dtype(embeds.dtype).itemsize,
                              jnp.dtype(embeds.dtype).itemsize, budget)
    assert N % tile_n == 0 and tile_n % 8 == 0
    return pl.pallas_call(
        _agg_mean_kernel,
        out_shape=jax.ShapeDtypeStruct((N, D), embeds.dtype),
        grid_spec=pltpu.PrefetchScalarGridSpec(
            num_scalar_prefetch=0,
            grid=(N // tile_n,),
            in_specs=[pl.BlockSpec((S, tile_n, D), lambda i: (0, i, 0))],
            out_specs=pl.BlockSpec((tile_n, D), lambda i: (i, 0)),
        ),
        compiler_params=pltpu.CompilerParams(
            dimension_semantics=("parallel",),
            vmem_limit_bytes=vmem_limit),
    )(embeds)


# ----------------------------------------------------------------------------
# Pure-JAX reference (mirrors the PyTorch forward for part_type == 3)
# ----------------------------------------------------------------------------
def _reference_part3(embeds, w1, b1, w2, b2):
    e = embeds.astype(jnp.float32)
    h = jnp.maximum(e @ w1 + jnp.reshape(b1, (1, -1)), 0.0)   # (S, N, D//2)
    s = h @ w2 + jnp.reshape(b2, (1, -1))                     # (S, N, 1)
    w = jax.nn.softmax(s, axis=0)
    return jnp.sum(w * e, axis=0)                             # (N, D)


if __name__ == "__main__":
    # Small deterministic shapes: slices=4, users=16, dim=128 (lane-dense minor dim)
    S, N, D = 4, 16, 128
    H = D // 2

    key = jax.random.PRNGKey(0)
    k_e, k_w1, k_b1, k_w2, k_b2 = jax.random.split(key, 5)

    embeds = jax.random.normal(k_e, (S, N, D), dtype=jnp.float32)

    # Synthetic parameters with Linear(D, D//2) / Linear(D//2, 1) shapes
    w1 = jax.random.normal(k_w1, (D, H), dtype=jnp.float32) * (1.0 / np.sqrt(D))
    b1 = jax.random.normal(k_b1, (1, H), dtype=jnp.float32) * 0.01
    w2 = jax.random.normal(k_w2, (H, 1), dtype=jnp.float32) * (1.0 / np.sqrt(H))
    b2 = jax.random.normal(k_b2, (1, 1), dtype=jnp.float32) * 0.01

    out = user_aggregator_part3(embeds, w1, b1, w2, b2)
    out = jax.block_until_ready(out)

    ref = _reference_part3(embeds, w1, b1, w2, b2)
    np.testing.assert_allclose(np.asarray(out), np.asarray(ref), rtol=2e-3, atol=2e-3)

    # Also exercise the part_type == 1 (mean) kernel
    out_mean = jax.block_until_ready(user_aggregator_part1(embeds))
    np.testing.assert_allclose(
        np.asarray(out_mean), np.asarray(jnp.mean(embeds, axis=0)),
        rtol=1e-5, atol=1e-5)

    print("KERNEL_OK")
</pallas_src>

<mosaic_0001>
module attributes {stable_mosaic.version = 11 : i64} {
  func.func @_agg_score_kernel(%arg0: i32, %arg1: memref<4x8x128xf32, #tpu.memory_space<vmem>>, %arg2: memref<128x64xf32, #tpu.memory_space<vmem>>, %arg3: memref<1x64xf32, #tpu.memory_space<vmem>>, %arg4: memref<1x64xf32, #tpu.memory_space<vmem>>, %arg5: memref<8x128xf32, #tpu.memory_space<vmem>>) attributes {dimension_semantics = [#tpu.dimension_semantics<parallel>], iteration_bounds = array<i64: 2>, scalar_prefetch = 0 : i64, scratch_operands = 0 : i64, tpu.core_type = #tpu.core_type<tc>, window_params = [{transform_indices = @transform_0, window_bounds = array<i64: 4, 8, 128>}, {pipeline_mode = #tpu.pipeline_mode<synchronous>, transform_indices = @transform_1, window_bounds = array<i64: 128, 64>}, {pipeline_mode = #tpu.pipeline_mode<synchronous>, transform_indices = @transform_2, window_bounds = array<i64: 1, 64>}, {pipeline_mode = #tpu.pipeline_mode<synchronous>, transform_indices = @transform_3, window_bounds = array<i64: 1, 64>}, {transform_indices = @transform_4, window_bounds = array<i64: 8, 128>}]} {
    %c0 = arith.constant 0 : index
    %c0_0 = arith.constant 0 : index
    %0 = vector.load %arg2[%c0, %c0_0] : memref<128x64xf32, #tpu.memory_space<vmem>>, vector<128x64xf32>
    %c0_1 = arith.constant 0 : index
    %c0_2 = arith.constant 0 : index
    %1 = vector.load %arg3[%c0_1, %c0_2] : memref<1x64xf32, #tpu.memory_space<vmem>>, vector<1x64xf32>
    %c0_3 = arith.constant 0 : index
    %c0_4 = arith.constant 0 : index
    %2 = vector.load %arg4[%c0_3, %c0_4] : memref<1x64xf32, #tpu.memory_space<vmem>>, vector<1x64xf32>
    %c0_5 = arith.constant 0 : index
    %c0_6 = arith.constant 0 : index
    %c0_7 = arith.constant 0 : index
    %3 = vector.load %arg1[%c0_5, %c0_6, %c0_7] : memref<4x8x128xf32, #tpu.memory_space<vmem>>, vector<1x8x128xf32>
    %4 = vector.shape_cast %3 : vector<1x8x128xf32> to vector<8x128xf32>
    %cst = arith.constant dense<0.000000e+00> : vector<8x64xf32>
    %5 = tpu.matmul %4, %0, %cst {dimension_numbers = #tpu.dot_dimension_numbers<[1], [0], [0], [1], [0, 0, 1, 1], [], []>} : vector<8x128xf32>, vector<128x64xf32>, vector<8x64xf32> -> vector<8x64xf32>
    %6 = vector.broadcast %1 : vector<1x64xf32> to vector<8x64xf32>
    %7 = arith.addf %5, %6 : vector<8x64xf32>
    %cst_8 = arith.constant 0.000000e+00 : f32
    %8 = vector.broadcast %cst_8 : f32 to vector<8x64xf32>
    %9 = arith.maximumf %7, %8 : vector<8x64xf32>
    %10 = vector.broadcast %2 : vector<1x64xf32> to vector<8x64xf32>
    %11 = arith.mulf %9, %10 : vector<8x64xf32>
    %cst_9 = arith.constant dense<0.000000e+00> : vector<8xf32>
    %12 = vector.multi_reduction <add>, %11, %cst_9 [1] : vector<8x64xf32> to vector<8xf32>
    %13 = vector.shape_cast %12 : vector<8xf32> to vector<8x1xf32>
    %c1 = arith.constant 1 : index
    %c0_10 = arith.constant 0 : index
    %c0_11 = arith.constant 0 : index
    %14 = vector.load %arg1[%c1, %c0_10, %c0_11] : memref<4x8x128xf32, #tpu.memory_space<vmem>>, vector<1x8x128xf32>
    %15 = vector.shape_cast %14 : vector<1x8x128xf32> to vector<8x128xf32>
    %cst_12 = arith.constant dense<0.000000e+00> : vector<8x64xf32>
    %16 = tpu.matmul %15, %0, %cst_12 {dimension_numbers = #tpu.dot_dimension_numbers<[1], [0], [0], [1], [0, 0, 1, 1], [], []>} : vector<8x128xf32>, vector<128x64xf32>, vector<8x64xf32> -> vector<8x64xf32>
    %17 = vector.broadcast %1 : vector<1x64xf32> to vector<8x64xf32>
    %18 = arith.addf %16, %17 : vector<8x64xf32>
    %cst_13 = arith.constant 0.000000e+00 : f32
    %19 = vector.broadcast %cst_13 : f32 to vector<8x64xf32>
    %20 = arith.maximumf %18, %19 : vector<8x64xf32>
    %21 = vector.broadcast %2 : vector<1x64xf32> to vector<8x64xf32>
    %22 = arith.mulf %20, %21 : vector<8x64xf32>
    %cst_14 = arith.constant dense<0.000000e+00> : vector<8xf32>
    %23 = vector.multi_reduction <add>, %22, %cst_14 [1] : vector<8x64xf32> to vector<8xf32>
    %24 = vector.shape_cast %23 : vector<8xf32> to vector<8x1xf32>
    %c2 = arith.constant 2 : index
    %c0_15 = arith.constant 0 : index
    %c0_16 = arith.constant 0 : index
    %25 = vector.load %arg1[%c2, %c0_15, %c0_16] : memref<4x8x128xf32, #tpu.memory_space<vmem>>, vector<1x8x128xf32>
    %26 = vector.shape_cast %25 : vector<1x8x128xf32> to vector<8x128xf32>
    %cst_17 = arith.constant dense<0.000000e+00> : vector<8x64xf32>
    %27 = tpu.matmul %26, %0, %cst_17 {dimension_numbers = #tpu.dot_dimension_numbers<[1], [0], [0], [1], [0, 0, 1, 1], [], []>} : vector<8x128xf32>, vector<128x64xf32>, vector<8x64xf32> -> vector<8x64xf32>
    %28 = vector.broadcast %1 : vector<1x64xf32> to vector<8x64xf32>
    %29 = arith.addf %27, %28 : vector<8x64xf32>
    %cst_18 = arith.constant 0.000000e+00 : f32
    %30 = vector.broadcast %cst_18 : f32 to vector<8x64xf32>
    %31 = arith.maximumf %29, %30 : vector<8x64xf32>
    %32 = vector.broadcast %2 : vector<1x64xf32> to vector<8x64xf32>
    %33 = arith.mulf %31, %32 : vector<8x64xf32>
    %cst_19 = arith.constant dense<0.000000e+00> : vector<8xf32>
    %34 = vector.multi_reduction <add>, %33, %cst_19 [1] : vector<8x64xf32> to vector<8xf32>
    %35 = vector.shape_cast %34 : vector<8xf32> to vector<8x1xf32>
    %c3 = arith.constant 3 : index
    %c0_20 = arith.constant 0 : index
    %c0_21 = arith.constant 0 : index
    %36 = vector.load %arg1[%c3, %c0_20, %c0_21] : memref<4x8x128xf32, #tpu.memory_space<vmem>>, vector<1x8x128xf32>
    %37 = vector.shape_cast %36 : vector<1x8x128xf32> to vector<8x128xf32>
    %cst_22 = arith.constant dense<0.000000e+00> : vector<8x64xf32>
    %38 = tpu.matmul %37, %0, %cst_22 {dimension_numbers = #tpu.dot_dimension_numbers<[1], [0], [0], [1], [0, 0, 1, 1], [], []>} : vector<8x128xf32>, vector<128x64xf32>, vector<8x64xf32> -> vector<8x64xf32>
    %39 = vector.broadcast %1 : vector<1x64xf32> to vector<8x64xf32>
    %40 = arith.addf %38, %39 : vector<8x64xf32>
    %cst_23 = arith.constant 0.000000e+00 : f32
    %41 = vector.broadcast %cst_23 : f32 to vector<8x64xf32>
    %42 = arith.maximumf %40, %41 : vector<8x64xf32>
    %43 = vector.broadcast %2 : vector<1x64xf32> to vector<8x64xf32>
    %44 = arith.mulf %42, %43 : vector<8x64xf32>
    %cst_24 = arith.constant dense<0.000000e+00> : vector<8xf32>
    %45 = vector.multi_reduction <add>, %44, %cst_24 [1] : vector<8x64xf32> to vector<8xf32>
    %46 = vector.shape_cast %45 : vector<8xf32> to vector<8x1xf32>
    %47 = arith.maximumf %13, %24 : vector<8x1xf32>
    %48 = arith.maximumf %47, %35 : vector<8x1xf32>
    %49 = arith.maximumf %48, %46 : vector<8x1xf32>
    %50 = arith.subf %13, %49 : vector<8x1xf32>
    %51 = math.exp %50 : vector<8x1xf32>
    %52 = arith.subf %24, %49 : vector<8x1xf32>
    %53 = math.exp %52 : vector<8x1xf32>
    %54 = arith.subf %35, %49 : vector<8x1xf32>
    %55 = math.exp %54 : vector<8x1xf32>
    %56 = arith.subf %46, %49 : vector<8x1xf32>
    %57 = math.exp %56 : vector<8x1xf32>
    %58 = arith.addf %51, %53 : vector<8x1xf32>
    %59 = arith.addf %58, %55 : vector<8x1xf32>
    %60 = arith.addf %59, %57 : vector<8x1xf32>
    %61 = tpu.reciprocal %60 : vector<8x1xf32> -> vector<8x1xf32>
    %62 = arith.mulf %51, %61 : vector<8x1xf32>
    %c0_25 = arith.constant 0 : index
    %c0_26 = arith.constant 0 : index
    %c0_27 = arith.constant 0 : index
    %63 = vector.load %arg1[%c0_25, %c0_26, %c0_27] : memref<4x8x128xf32, #tpu.memory_space<vmem>>, vector<1x8x128xf32>
    %64 = vector.shape_cast %63 : vector<1x8x128xf32> to vector<8x128xf32>
    %65 = vector.broadcast %62 : vector<8x1xf32> to vector<8x128xf32>
    %66 = arith.mulf %65, %64 : vector<8x128xf32>
    %67 = arith.mulf %53, %61 : vector<8x1xf32>
    %c1_28 = arith.constant 1 : index
    %c0_29 = arith.constant 0 : index
    %c0_30 = arith.constant 0 : index
    %68 = vector.load %arg1[%c1_28, %c0_29, %c0_30] : memref<4x8x128xf32, #tpu.memory_space<vmem>>, vector<1x8x128xf32>
    %69 = vector.shape_cast %68 : vector<1x8x128xf32> to vector<8x128xf32>
    %70 = vector.broadcast %67 : vector<8x1xf32> to vector<8x128xf32>
    %71 = arith.mulf %70, %69 : vector<8x128xf32>
    %72 = arith.addf %66, %71 : vector<8x128xf32>
    %73 = arith.mulf %55, %61 : vector<8x1xf32>
    %c2_31 = arith.constant 2 : index
    %c0_32 = arith.constant 0 : index
    %c0_33 = arith.constant 0 : index
    %74 = vector.load %arg1[%c2_31, %c0_32, %c0_33] : memref<4x8x128xf32, #tpu.memory_space<vmem>>, vector<1x8x128xf32>
    %75 = vector.shape_cast %74 : vector<1x8x128xf32> to vector<8x128xf32>
    %76 = vector.broadcast %73 : vector<8x1xf32> to vector<8x128xf32>
    %77 = arith.mulf %76, %75 : vector<8x128xf32>
    %78 = arith.addf %72, %77 : vector<8x128xf32>
    %79 = arith.mulf %57, %61 : vector<8x1xf32>
    %c3_34 = arith.constant 3 : index
    %c0_35 = arith.constant 0 : index
    %c0_36 = arith.constant 0 : index
    %80 = vector.load %arg1[%c3_34, %c0_35, %c0_36] : memref<4x8x128xf32, #tpu.memory_space<vmem>>, vector<1x8x128xf32>
    %81 = vector.shape_cast %80 : vector<1x8x128xf32> to vector<8x128xf32>
    %82 = vector.broadcast %79 : vector<8x1xf32> to vector<8x128xf32>
    %83 = arith.mulf %82, %81 : vector<8x128xf32>
    %84 = arith.addf %78, %83 : vector<8x128xf32>
    %c0_37 = arith.constant 0 : index
    %c0_38 = arith.constant 0 : index
    %85 = vector.load %arg5[%c0_37, %c0_38] : memref<8x128xf32, #tpu.memory_space<vmem>>, vector<8x128xf32>
    tpu.vector_store %arg5[%c0_37, %c0_38], %84 {strides = array<i32>} : memref<8x128xf32, #tpu.memory_space<vmem>>, vector<8x128xf32>,
    return
  }
  func.func @transform_0(%arg0: i32) -> (i32, i32, i32) {
    %c0_i32 = arith.constant 0 : i32
    %c0_i32_0 = arith.constant 0 : i32
    %c0_i32_1 = arith.constant 0 : i32
    return %c0_i32, %arg0, %c0_i32_0 : i32, i32, i32
  }
  func.func @transform_1(%arg0: i32) -> (i32, i32) {
    %c0_i32 = arith.constant 0 : i32
    %c0_i32_0 = arith.constant 0 : i32
    %c0_i32_1 = arith.constant 0 : i32
    return %c0_i32, %c0_i32_0 : i32, i32
  }
  func.func @transform_2(%arg0: i32) -> (i32, i32) {
    %c0_i32 = arith.constant 0 : i32
    %c0_i32_0 = arith.constant 0 : i32
    %c0_i32_1 = arith.constant 0 : i32
    return %c0_i32, %c0_i32_0 : i32, i32
  }
  func.func @transform_3(%arg0: i32) -> (i32, i32) {
    %c0_i32 = arith.constant 0 : i32
    %c0_i32_0 = arith.constant 0 : i32
    %c0_i32_1 = arith.constant 0 : i32
    return %c0_i32, %c0_i32_0 : i32, i32
  }
  func.func @transform_4(%arg0: i32) -> (i32, i32) {
    %c0_i32 = arith.constant 0 : i32
    %c0_i32_0 = arith.constant 0 : i32
    return %arg0, %c0_i32 : i32, i32
  }
}

</mosaic_0001>

<llo_original>
// kernel: tpu_custom_call.1
$region0: #{tpu_custom_call.1}
  #allocation0 [shape = 'u32[]', space=smem, size = 0x4, offset = 0x4, fixed_abs, tag = 'smem constant byte address 0x4 - core index']
  #allocation1 [shape = 'u32[144,128]{1,0:T(1,128)}', space=vmem, size = 0x12000, scoped, tag = 'internal scratch']
  %s0 = inlined_call_operand.vmem [shape: f32[4,16,128], index: 0, kind: input, shape index: {}]
  %s1 = inlined_call_operand.vmem [shape: f32[128,64], index: 1, kind: input, shape index: {}]
  %s2 = inlined_call_operand.vmem [shape: f32[1,64], index: 2, kind: input, shape index: {}]
  %s3 = inlined_call_operand.vmem [shape: f32[1,64], index: 3, kind: input, shape index: {}]
  %s4 = inlined_call_operand.hbm [shape: f32[16,128], index: 4, kind: output, shape index: {}]
  %s5 = sld [smem:[#allocation0]]
  $region87: #{tpu_custom_call.1} parent=0
    _
  %s7 = ssub.s32 1, %s5
  %s8 = scalar_select 0, %s7, %s5
  $region1: #{tpu_custom_call.1} parent=0
    #allocation2 [shape = 'u8[32768]{0}', space=vmem, size = 0x8000, scoped, tag = 'input window, operand 0']
    #allocation3 [shape = 'u8[8192]{0}', space=vmem, size = 0x2000, scoped, tag = 'output window, operand 0']
    #allocation4 [shape = 's32[2]{0}', space=sflag, size = 0x8, scoped, tag = 'scoped memory for tpu_custom_call.1']
    %9 = vsyncpa [#allocation4], 0
    %s10 = scalar_lea.sflag [#allocation4], 1
    %11 = vsyncpa %s10, 0
    loop: start=0, step=1, limit=4
    $region2: #{tpu_custom_call.1} parent=1 // loop_pre_header
      _
    $region3: #{tpu_custom_call.1} parent=1 // loop_header
      %s13 = sphi 0, %s17
      %p14 = scmp.ge.s32.totalorder %s13, 4
      %s23 = sphi 0, %s25
      %s26 = sphi 0, %s23
      %s27 = sphi 0, %s26
      %s43 = sphi 0, %s27
      %s47 = sphi 0, %s47
      %s49 = sphi 0, %s47
      %s50 = sphi 0, %s49
      %s64 = sphi 0, %s50
      %s68 = sphi 0, %s68
      %s70 = sphi 0, %s68
      %s71 = sphi 0, %s70
      %s85 = sphi 0, %s71
      %s89 = sphi 0, %s89
      %s91 = sphi 0, %s89
      %s92 = sphi 0, %s91
      %s106 = sphi 0, %s92
      %s112 = sphi 0, %s114
      %s115 = sphi 0, %s112
      %s116 = sphi 0, %s115
      %s132 = sphi 0, %s116
    $region4: #{tpu_custom_call.1} parent=1 // loop_header_branch
      %16 = sbr.rel (%p14) target = $region8
    $region5: #{tpu_custom_call.1} parent=1 // loop_body
      %s18 = ssub.s32 %s13, 1
      %s19 = ssub.s32 %s13, 2
      %s20 = sadd.s32 %s13, 1
      %s21 = ssub.s32 %s13, %s20
      %p22 = scmp.eq.s32.totalorder %s21, 0
      %s24 = sadd.s32 %s23, 1
      %s25 = scalar_select %p22, %s23, %s24
      %p28 = pneg %p22
      %p29 = scmp.eq.s32.totalorder %s13, 1
      %p30 = por %p28, %p29
      %p31 = scmp.ne.s32.totalorder %s23, %s26
      %p32 = scmp.eq.s32.totalorder %s13, 0
      %p33 = por %p31, %p32
      %p34 = scmp.ne.s32.totalorder %s23, %s26
      %p35 = scmp.eq.s32.totalorder %s18, 1
      %p36 = por %p34, %p35
      %p37 = scmp.ne.s32.totalorder %s26, %s27
      %p38 = scmp.eq.s32.totalorder %s18, 0
      %p39 = por %p37, %p38
      %p40 = scmp.ne.s32.totalorder %s26, %s27
      %p41 = scmp.eq.s32.totalorder %s19, 1
      %p42 = por %p40, %p41
      %p44 = scmp.ne.s32.totalorder %s27, %s43
      %p45 = scmp.eq.s32.totalorder %s19, 0
      %p46 = por %p44, %p45
      %s48 = sadd.s32 %s47, 1
      %p51 = scmp.eq.s32.totalorder %s13, 1
      %p52 = scmp.ne.s32.totalorder %s47, %s49
      %p53 = scmp.eq.s32.totalorder %s13, 0
      %p54 = por %p52, %p53
      %p55 = scmp.ne.s32.totalorder %s47, %s49
      %p56 = scmp.eq.s32.totalorder %s18, 1
      %p57 = por %p55, %p56
      %p58 = scmp.ne.s32.totalorder %s49, %s50
      %p59 = scmp.eq.s32.totalorder %s18, 0
      %p60 = por %p58, %p59
      %p61 = scmp.ne.s32.totalorder %s49, %s50
      %p62 = scmp.eq.s32.totalorder %s19, 1
      %p63 = por %p61, %p62
      %p65 = scmp.ne.s32.totalorder %s50, %s64
      %p66 = scmp.eq.s32.totalorder %s19, 0
      %p67 = por %p65, %p66
      %s69 = sadd.s32 %s68, 1
      %p72 = scmp.eq.s32.totalorder %s13, 1
      %p73 = scmp.ne.s32.totalorder %s68, %s70
      %p74 = scmp.eq.s32.totalorder %s13, 0
      %p75 = por %p73, %p74
      %p76 = scmp.ne.s32.totalorder %s68, %s70
      %p77 = scmp.eq.s32.totalorder %s18, 1
      %p78 = por %p76, %p77
      %p79 = scmp.ne.s32.totalorder %s70, %s71
      %p80 = scmp.eq.s32.totalorder %s18, 0
      %p81 = por %p79, %p80
      %p82 = scmp.ne.s32.totalorder %s70, %s71
      %p83 = scmp.eq.s32.totalorder %s19, 1
      %p84 = por %p82, %p83
      %p86 = scmp.ne.s32.totalorder %s71, %s85
      %p87 = scmp.eq.s32.totalorder %s19, 0
      %p88 = por %p86, %p87
      %s90 = sadd.s32 %s89, 1
      %p93 = scmp.eq.s32.totalorder %s13, 1
      %p94 = scmp.ne.s32.totalorder %s89, %s91
      %p95 = scmp.eq.s32.totalorder %s13, 0
      %p96 = por %p94, %p95
      %p97 = scmp.ne.s32.totalorder %s89, %s91
      %p98 = scmp.eq.s32.totalorder %s18, 1
      %p99 = por %p97, %p98
      %p100 = scmp.ne.s32.totalorder %s91, %s92
      %p101 = scmp.eq.s32.totalorder %s18, 0
      %p102 = por %p100, %p101
      %p103 = scmp.ne.s32.totalorder %s91, %s92
      %p104 = scmp.eq.s32.totalorder %s19, 1
      %p105 = por %p103, %p104
      %p107 = scmp.ne.s32.totalorder %s92, %s106
      %p108 = scmp.eq.s32.totalorder %s19, 0
      %p109 = por %p107, %p108
      %s110 = ssub.s32 %s13, %s20
      %p111 = scmp.eq.s32.totalorder %s110, 0
      %s113 = sadd.s32 %s112, 1
      %s114 = scalar_select %p111, %s112, %s113
      %p117 = pneg %p111
      %p118 = scmp.eq.s32.totalorder %s13, 1
      %p119 = por %p117, %p118
      %p120 = scmp.ne.s32.totalorder %s112, %s115
      %p121 = scmp.eq.s32.totalorder %s13, 0
      %p122 = por %p120, %p121
      %p123 = scmp.ne.s32.totalorder %s112, %s115
      %p124 = scmp.eq.s32.totalorder %s18, 1
      %p125 = por %p123, %p124
      %p126 = scmp.ne.s32.totalorder %s115, %s116
      %p127 = scmp.eq.s32.totalorder %s18, 0
      %p128 = por %p126, %p127
      %p129 = scmp.ne.s32.totalorder %s115, %s116
      %p130 = scmp.eq.s32.totalorder %s19, 1
      %p131 = por %p129, %p130
      %p133 = scmp.ne.s32.totalorder %s116, %s132
      %p134 = scmp.eq.s32.totalorder %s19, 0
      %p135 = por %p133, %p134
      %p136 = scmp.le.s32.totalorder 1, %s13
      %p137 = scmp.lt.s32.totalorder %s13, 3
      %p138 = pnand %p136, %p137
      %p139 = pneg %p138
      // Predicated region
      $region9: #{tpu_custom_call.1} parent=5 // pred_check
        _
      $region10: #{tpu_custom_call.1} parent=5 // pred_check_branch
        %141 = sbr.rel (%p138) target = $region12
      $region11: #{tpu_custom_call.1} parent=5 // pred_region
        %s142 = ssub.s32 %s13, 1
        // Predicated region
        $region13: #{tpu_custom_call.1} parent=11 // pred_check
          %p143 = pneg %p60
        $region14: #{tpu_custom_call.1} parent=11 // pred_check_branch
          %145 = sbr.rel (%p143) target = $region16
        $region15: #{tpu_custom_call.1} parent=11 // pred_region
          _
        $region16: #{tpu_custom_call.1} parent=11 // pred_fallthru
          _
        // Predicated region
        $region17: #{tpu_custom_call.1} parent=11 // pred_check
          %p146 = pneg %p81
        $region18: #{tpu_custom_call.1} parent=11 // pred_check_branch
          %148 = sbr.rel (%p146) target = $region20
        $region19: #{tpu_custom_call.1} parent=11 // pred_region
          _
        $region20: #{tpu_custom_call.1} parent=11 // pred_fallthru
          _
        // Predicated region
        $region21: #{tpu_custom_call.1} parent=11 // pred_check
          %p149 = pneg %p102
        $region22: #{tpu_custom_call.1} parent=11 // pred_check_branch
          %151 = sbr.rel (%p149) target = $region24
        $region23: #{tpu_custom_call.1} parent=11 // pred_region
          _
        $region24: #{tpu_custom_call.1} parent=11 // pred_fallthru
          _
      $region12: #{tpu_custom_call.1} parent=5 // pred_fallthru
        _
      %p152 = scmp.lt.s32.totalorder %s13, 2
      // Predicated region
      $region25: #{tpu_custom_call.1} parent=5 // pred_check
        %p153 = pneg %p152
      $region26: #{tpu_custom_call.1} parent=5 // pred_check_branch
        %155 = sbr.rel (%p153) target = $region28
      $region27: #{tpu_custom_call.1} parent=5 // pred_region
        // Predicated region
        $region29: #{tpu_custom_call.1} parent=27 // pred_check
          %p156 = pneg %p33
        $region30: #{tpu_custom_call.1} parent=27 // pred_check_branch
          %158 = sbr.rel (%p156) target = $region32
        $region31: #{tpu_custom_call.1} parent=27 // pred_region
          %s159 = sand.u32 %s23, 1
          %s160 = sand.u32 %s23, 1
          %s161 = smul.addr %s160, 32
          %s162 = scalar_lea.vmem [#allocation2], %s161
          %s163 = smul.addr %s13, 8
          %s164 = scalar_lea.vmem %s0, %s163
          // Predicated region
          $region33: #{tpu_custom_call.1} parent=31 // pred_check
            _
          $region34: #{tpu_custom_call.1} parent=31 // pred_check_branch
            %166 = sbr.rel (0) target = $region36
          $region35: #{tpu_custom_call.1} parent=31 // pred_region
            // Predicated region
            $region37: #{tpu_custom_call.1} parent=35 // pred_check
              _
            $region38: #{tpu_custom_call.1} parent=35 // pred_check_branch
              %168 = sbr.rel (0) target = $region40
            $region39: #{tpu_custom_call.1} parent=35 // pred_region
              // Predicated region
              $region52: #{tpu_custom_call.1} parent=39 // pred_check
                _
              $region53: #{tpu_custom_call.1} parent=39 // pred_check_branch
                %190 = sbr.rel (0) target = $region55
              $region54: #{tpu_custom_call.1} parent=39 // pred_region
                loop: start=0, step=1, limit=1
                $region56: #{tpu_custom_call.1} parent=54 // loop_pre_header
                  _
                $region57: #{tpu_custom_call.1} parent=54 // loop_header
                  %s192 = sphi 0, %s196
                  %p193 = scmp.ge.s32.totalorder %s192, 1
                  %s197 = sphi %s164, %s164
                  %s198 = sphi %s162, %s162
                $region58: #{tpu_custom_call.1} parent=54 // loop_header_branch
                  %195 = sbr.rel (%p193) target = $region62
                $region59: #{tpu_custom_call.1} parent=54 // loop_body
                  %v199 = vld [vmem:[%s197] sm:$0xff]
                  %200 = vst [vmem:[%s198] sm:$0xff] %v199
                  %v201 = vld [vmem:[%s197 + $0x10] sm:$0xff]
                  %202 = vst [vmem:[%s198 + $0x8] sm:$0xff] %v201
                  %v203 = vld [vmem:[%s197 + $0x20] sm:$0xff]
                  %204 = vst [vmem:[%s198 + $0x10] sm:$0xff] %v203
                  %v205 = vld [vmem:[%s197 + $0x30] sm:$0xff]
                  %206 = vst [vmem:[%s198 + $0x18] sm:$0xff] %v205
                $region60: #{tpu_custom_call.1} parent=54 // loop_footer
                  %s196 = sadd.s32 1, %s192
                $region61: #{tpu_custom_call.1} parent=54 // loop_footer_branch
                  %191 = sbr.rel target = $region57
                $region62: #{tpu_custom_call.1} parent=54 // loop_exit
                  _
              $region55: #{tpu_custom_call.1} parent=39 // pred_fallthru
                _
              // Predicated region
              $region63: #{tpu_custom_call.1} parent=39 // pred_check
                _
              $region64: #{tpu_custom_call.1} parent=39 // pred_check_branch
                %208 = sbr.rel target = $region66
              $region65: #{tpu_custom_call.1} parent=39 // pred_region
                _
              $region66: #{tpu_custom_call.1} parent=39 // pred_fallthru
                _
            $region40: #{tpu_custom_call.1} parent=35 // pred_fallthru
              _
            // Predicated region
            $region41: #{tpu_custom_call.1} parent=35 // pred_check
              _
            $region42: #{tpu_custom_call.1} parent=35 // pred_check_branch
              %170 = sbr.rel target = $region44
            $region43: #{tpu_custom_call.1} parent=35 // pred_region
              %s172 = ssub.s32 256, 1
              loop: start=0, step=1, limit=1
              $region45: #{tpu_custom_call.1} parent=43 // loop_pre_header
                _
              $region46: #{tpu_custom_call.1} parent=43 // loop_header
                %s174 = sphi 0, %s178
                %p175 = scmp.ge.s32.totalorder %s174, 1
                %s179 = sphi %s164, %s164
                %s180 = sphi %s162, %s162
              $region47: #{tpu_custom_call.1} parent=43 // loop_header_branch
                %177 = sbr.rel (%p175) target = $region51
              $region48: #{tpu_custom_call.1} parent=43 // loop_body
                %v181 = vld [vmem:[%s179] sm:%s172]
                %182 = vst [vmem:[%s180] sm:%s172] %v181
                %v183 = vld [vmem:[%s179 + $0x10] sm:%s172]
                %184 = vst [vmem:[%s180 + $0x8] sm:%s172] %v183
                %v185 = vld [vmem:[%s179 + $0x20] sm:%s172]
                %186 = vst [vmem:[%s180 + $0x10] sm:%s172] %v185
                %v187 = vld [vmem:[%s179 + $0x30] sm:%s172]
                %188 = vst [vmem:[%s180 + $0x18] sm:%s172] %v187
              $region49: #{tpu_custom_call.1} parent=43 // loop_footer
                %s178 = sadd.s32 1, %s174
              $region50: #{tpu_custom_call.1} parent=43 // loop_footer_branch
                %173 = sbr.rel target = $region46
              $region51: #{tpu_custom_call.1} parent=43 // loop_exit
                _
            $region44: #{tpu_custom_call.1} parent=35 // pred_fallthru
              _
          $region36: #{tpu_custom_call.1} parent=31 // pred_fallthru
            _
          %209 = vnop
        $region32: #{tpu_custom_call.1} parent=27 // pred_fallthru
          _
      $region28: #{tpu_custom_call.1} parent=5 // pred_fallthru
        _
      %p210 = scmp.le.s32.totalorder 1, %s13
      %p211 = scmp.lt.s32.totalorder %s13, 3
      %p212 = pnand %p210, %p211
      %p213 = pneg %p212
      // Predicated region
      $region67: #{tpu_custom_call.1} parent=5 // pred_check
        _
      $region68: #{tpu_custom_call.1} parent=5 // pred_check_branch
        %215 = sbr.rel (%p212) target = $region70
      $region69: #{tpu_custom_call.1} parent=5 // pred_region
        %s216 = ssub.s32 %s13, 1
        %s217 = sand.u32 %s26, 1
        %s218 = sand.u32 %s26, 1
        %s219 = smul.addr %s218, 32
        %s220 = scalar_lea.vmem [#allocation2], %s219
        // Predicated region
        $region71: #{tpu_custom_call.1} parent=69 // pred_check
          %p221 = pneg %p39
        $region72: #{tpu_custom_call.1} parent=69 // pred_check_branch
          %223 = sbr.rel (%p221) target = $region74
        $region73: #{tpu_custom_call.1} parent=69 // pred_region
          _
        $region74: #{tpu_custom_call.1} parent=69 // pred_fallthru
          _
        %s224 = sand.u32 %s26, 1
        %s225 = sand.u32 %s26, 1
        %s226 = smul.addr %s225, 32
        %s227 = scalar_lea.vmem [#allocation2], %s226
        %p228 = pneg %p39
        %p229 = pneg %p36
        %p230 = pneg %p60
        %p231 = pneg %p57
        %p232 = pneg %p81
        %p233 = pneg %p78
        %p234 = pneg %p102
        %p235 = pneg %p99
        %p236 = pneg %p128
        %p237 = pneg %p125
        %s238 = sand.u32 %s115, 1
        %s239 = scalar_lea.sflag [#allocation4], %s238
        %s240 = sand.u32 %s115, 1
        %s241 = smul.addr %s240, 8
        %s242 = scalar_lea.vmem [#allocation3], %s241
        %v243 = vld [vmem:[%s1] sm:$0xff]
        %v244 = vld [vmem:[%s1 + $0x8] sm:$0xff]
        %v245 = vld [vmem:[%s1 + $0x10] sm:$0xff]
        %v246 = vld [vmem:[%s1 + $0x18] sm:$0xff]
        %v247 = vld [vmem:[%s1 + $0x20] sm:$0xff]
        %v248 = vld [vmem:[%s1 + $0x28] sm:$0xff]
        %v249 = vld [vmem:[%s1 + $0x30] sm:$0xff]
        %v250 = vld [vmem:[%s1 + $0x38] sm:$0xff]
        %v251 = vld [vmem:[%s1 + $0x40] sm:$0xff]
        %v252 = vld [vmem:[%s1 + $0x48] sm:$0xff]
        %v253 = vld [vmem:[%s1 + $0x50] sm:$0xff]
        %v254 = vld [vmem:[%s1 + $0x58] sm:$0xff]
        %v255 = vld [vmem:[%s1 + $0x60] sm:$0xff]
        %v256 = vld [vmem:[%s1 + $0x68] sm:$0xff]
        %v257 = vld [vmem:[%s1 + $0x70] sm:$0xff]
        %v258 = vld [vmem:[%s1 + $0x78] sm:$0xff]
        %v259 = vld [vmem:[%s2] sm:$0x1]
        %v260 = vld [vmem:[%s3] sm:$0x1]
        %v261 = vld [vmem:[%s220] sm:$0xff]
        %v263 = vlaneseq
        %v264 = vshrl.u32 %v263, 7
        %v265 = vsub.s32 0, %v264
        %v266 = vrot.slane %v259, %v265
        %268 = vmatprep.subr.mxu0 0.0
        %269 = vmatpush1.msra.mxu0 %v258
        %270 = vmatprep.subr.mxu0 0.0
        %271 = vmatpush1.msra.mxu0 %v257
        %272 = vmatprep.subr.mxu0 0.0
        %273 = vmatpush1.msra.mxu0 %v256
        %274 = vmatprep.subr.mxu0 0.0
        %275 = vmatpush1.msra.mxu0 %v255
        %276 = vmatprep.subr.mxu0 0.0
        %277 = vmatpush1.msra.mxu0 %v254
        %278 = vmatprep.subr.mxu0 0.0
        %279 = vmatpush1.msra.mxu0 %v253
        %280 = vmatprep.subr.mxu0 0.0
        %281 = vmatpush1.msra.mxu0 %v252
        %282 = vmatprep.subr.mxu0 0.0
        %283 = vmatpush1.msra.mxu0 %v251
        %284 = vmatprep.subr.mxu0 0.0
        %285 = vmatpush1.msra.mxu0 %v250
        %286 = vmatprep.subr.mxu0 0.0
        %287 = vmatpush1.msra.mxu0 %v249
        %288 = vmatprep.subr.mxu0 0.0
        %289 = vmatpush1.msra.mxu0 %v248
        %290 = vmatprep.subr.mxu0 0.0
        %291 = vmatpush1.msra.mxu0 %v247
        %292 = vmatprep.subr.mxu0 0.0
        %293 = vmatpush1.msra.mxu0 %v246
        %294 = vmatprep.subr.mxu0 0.0
        %295 = vmatpush1.msra.mxu0 %v245
        %296 = vmatprep.subr.mxu0 0.0
        %297 = vmatpush1.msra.mxu0 %v244
        %298 = vmatprep.subr.mxu0 0.0
        %299 = vmatpush1.msra.mxu0 %v243
        %300 = vmatprep.subr.mxu0 0.0
        %301 = vmatpush2.msra.mxu0 0.0
        %302 = vmatprep.subr.mxu0 0.0
        %303 = vmatpush2.msra.mxu0 0.0
        %304 = vmatprep.subr.mxu0 0.0
        %305 = vmatpush2.msra.mxu0 0.0
        %306 = vmatprep.subr.mxu0 0.0
        %307 = vmatpush2.msra.mxu0 0.0
        %308 = vmatprep.subr.mxu0 0.0
        %309 = vmatpush2.msra.mxu0 0.0
        %310 = vmatprep.subr.mxu0 0.0
        %311 = vmatpush2.msra.mxu0 0.0
        %312 = vmatprep.subr.mxu0 0.0
        %313 = vmatpush2.msra.mxu0 0.0
        %314 = vmatprep.subr.mxu0 0.0
        %315 = vmatpush2.msra.mxu0 0.0
        %316 = vmatprep.subr.mxu0 0.0
        %317 = vmatpush2.msra.mxu0 0.0
        %318 = vmatprep.subr.mxu0 0.0
        %319 = vmatpush2.msra.mxu0 0.0
        %320 = vmatprep.subr.mxu0 0.0
        %321 = vmatpush2.msra.mxu0 0.0
        %322 = vmatprep.subr.mxu0 0.0
        %323 = vmatpush2.msra.mxu0 0.0
        %324 = vmatprep.subr.mxu0 0.0
        %325 = vmatpush2.msra.mxu0 0.0
        %326 = vmatprep.subr.mxu0 0.0
        %327 = vmatpush2.msra.mxu0 0.0
        %328 = vmatprep.subr.mxu0 0.0
        %329 = vmatpush2.msra.mxu0 0.0
        %330 = vmatprep.subr.mxu0 0.0
        %331 = vmatpush2.msra.mxu0 0.0
        %332 = vmatprep.mubr.f32.mxu0 0.0
        %333 = vmatmul.mubr.f32.gmra.mxu0 %v261
        %v334 = vpop.f32.mrf.mxu0
        %v335 = vadd.f32 %v266, %v334
        %v336 = vpop.f32.mrf.mxu0
        %337 = vdwg.mxu0
        %v338 = vmax.f32 %v335, 0.0
        %v340 = vlaneseq
        %v341 = vshrl.u32 %v340, 7
        %v342 = vsub.s32 0, %v341
        %v343 = vrot.slane %v260, %v342
        %v345 = vmul.f32 %v338, %v343
        %vm346 = vcmask 523264
        %v347 = vsel %vm346, %v345, 0.0
        %348 = vadd.xlane.f32.xlu0 %v347
        %v349 = vpop.xlane.xlu0 %348
        %s350 = scalar_lea.vmem %s220, 8 [#allocation2]
        %v351 = vld [vmem:[%s350] sm:$0xff]
        %352 = vmatprep.subr.mxu0 0.0
        %353 = vmatpush1.msra.mxu0 %v258
        %354 = vmatprep.subr.mxu0 0.0
        %355 = vmatpush1.msra.mxu0 %v257
        %356 = vmatprep.subr.mxu0 0.0
        %357 = vmatpush1.msra.mxu0 %v256
        %358 = vmatprep.subr.mxu0 0.0
        %359 = vmatpush1.msra.mxu0 %v255
        %360 = vmatprep.subr.mxu0 0.0
        %361 = vmatpush1.msra.mxu0 %v254
        %362 = vmatprep.subr.mxu0 0.0
        %363 = vmatpush1.msra.mxu0 %v253
        %364 = vmatprep.subr.mxu0 0.0
        %365 = vmatpush1.msra.mxu0 %v252
        %366 = vmatprep.subr.mxu0 0.0
        %367 = vmatpush1.msra.mxu0 %v251
        %368 = vmatprep.subr.mxu0 0.0
        %369 = vmatpush1.msra.mxu0 %v250
        %370 = vmatprep.subr.mxu0 0.0
        %371 = vmatpush1.msra.mxu0 %v249
        %372 = vmatprep.subr.mxu0 0.0
        %373 = vmatpush1.msra.mxu0 %v248
        %374 = vmatprep.subr.mxu0 0.0
        %375 = vmatpush1.msra.mxu0 %v247
        %376 = vmatprep.subr.mxu0 0.0
        %377 = vmatpush1.msra.mxu0 %v246
        %378 = vmatprep.subr.mxu0 0.0
        %379 = vmatpush1.msra.mxu0 %v245
        %380 = vmatprep.subr.mxu0 0.0
        %381 = vmatpush1.msra.mxu0 %v244
        %382 = vmatprep.subr.mxu0 0.0
        %383 = vmatpush1.msra.mxu0 %v243
        %384 = vmatprep.subr.mxu0 0.0
        %385 = vmatpush2.msra.mxu0 0.0
        %386 = vmatprep.subr.mxu0 0.0
        %387 = vmatpush2.msra.mxu0 0.0
        %388 = vmatprep.subr.mxu0 0.0
        %389 = vmatpush2.msra.mxu0 0.0
        %390 = vmatprep.subr.mxu0 0.0
        %391 = vmatpush2.msra.mxu0 0.0
        %392 = vmatprep.subr.mxu0 0.0
        %393 = vmatpush2.msra.mxu0 0.0
        %394 = vmatprep.subr.mxu0 0.0
        %395 = vmatpush2.msra.mxu0 0.0
        %396 = vmatprep.subr.mxu0 0.0
        %397 = vmatpush2.msra.mxu0 0.0
        %398 = vmatprep.subr.mxu0 0.0
        %399 = vmatpush2.msra.mxu0 0.0
        %400 = vmatprep.subr.mxu0 0.0
        %401 = vmatpush2.msra.mxu0 0.0
        %402 = vmatprep.subr.mxu0 0.0
        %403 = vmatpush2.msra.mxu0 0.0
        %404 = vmatprep.subr.mxu0 0.0
        %405 = vmatpush2.msra.mxu0 0.0
        %406 = vmatprep.subr.mxu0 0.0
        %407 = vmatpush2.msra.mxu0 0.0
        %408 = vmatprep.subr.mxu0 0.0
        %409 = vmatpush2.msra.mxu0 0.0
        %410 = vmatprep.subr.mxu0 0.0
        %411 = vmatpush2.msra.mxu0 0.0
        %412 = vmatprep.subr.mxu0 0.0
        %413 = vmatpush2.msra.mxu0 0.0
        %414 = vmatprep.subr.mxu0 0.0
        %415 = vmatpush2.msra.mxu0 0.0
        %416 = vmatprep.mubr.f32.mxu0 0.0
        %417 = vmatmul.mubr.f32.gmra.mxu0 %v351
        %v418 = vpop.f32.mrf.mxu0
        %v419 = vadd.f32 %v266, %v418
        %v420 = vpop.f32.mrf.mxu0
        %421 = vdwg.mxu0
        %v422 = vmax.f32 %v419, 0.0
        %v423 = vmul.f32 %v422, %v343
        %v424 = vsel %vm346, %v423, 0.0
        %425 = vadd.xlane.f32.xlu0 %v424
        %v426 = vpop.xlane.xlu0 %425
        %s427 = scalar_lea.vmem %s220, 16 [#allocation2]
        %v428 = vld [vmem:[%s427] sm:$0xff]
        %429 = vmatprep.subr.mxu0 0.0
        %430 = vmatpush1.msra.mxu0 %v258
        %431 = vmatprep.subr.mxu0 0.0
        %432 = vmatpush1.msra.mxu0 %v257
        %433 = vmatprep.subr.mxu0 0.0
        %434 = vmatpush1.msra.mxu0 %v256
        %435 = vmatprep.subr.mxu0 0.0
        %436 = vmatpush1.msra.mxu0 %v255
        %437 = vmatprep.subr.mxu0 0.0
        %438 = vmatpush1.msra.mxu0 %v254
        %439 = vmatprep.subr.mxu0 0.0
        %440 = vmatpush1.msra.mxu0 %v253
        %441 = vmatprep.subr.mxu0 0.0
        %442 = vmatpush1.msra.mxu0 %v252
        %443 = vmatprep.subr.mxu0 0.0
        %444 = vmatpush1.msra.mxu0 %v251
        %445 = vmatprep.subr.mxu0 0.0
        %446 = vmatpush1.msra.mxu0 %v250
        %447 = vmatprep.subr.mxu0 0.0
        %448 = vmatpush1.msra.mxu0 %v249
        %449 = vmatprep.subr.mxu0 0.0
        %450 = vmatpush1.msra.mxu0 %v248
        %451 = vmatprep.subr.mxu0 0.0
        %452 = vmatpush1.msra.mxu0 %v247
        %453 = vmatprep.subr.mxu0 0.0
        %454 = vmatpush1.msra.mxu0 %v246
        %455 = vmatprep.subr.mxu0 0.0
        %456 = vmatpush1.msra.mxu0 %v245
        %457 = vmatprep.subr.mxu0 0.0
        %458 = vmatpush1.msra.mxu0 %v244
        %459 = vmatprep.subr.mxu0 0.0
        %460 = vmatpush1.msra.mxu0 %v243
        %461 = vmatprep.subr.mxu0 0.0
        %462 = vmatpush2.msra.mxu0 0.0
        %463 = vmatprep.subr.mxu0 0.0
        %464 = vmatpush2.msra.mxu0 0.0
        %465 = vmatprep.subr.mxu0 0.0
        %466 = vmatpush2.msra.mxu0 0.0
        %467 = vmatprep.subr.mxu0 0.0
        %468 = vmatpush2.msra.mxu0 0.0
        %469 = vmatprep.subr.mxu0 0.0
        %470 = vmatpush2.msra.mxu0 0.0
        %471 = vmatprep.subr.mxu0 0.0
        %472 = vmatpush2.msra.mxu0 0.0
        %473 = vmatprep.subr.mxu0 0.0
        %474 = vmatpush2.msra.mxu0 0.0
        %475 = vmatprep.subr.mxu0 0.0
        %476 = vmatpush2.msra.mxu0 0.0
        %477 = vmatprep.subr.mxu0 0.0
        %478 = vmatpush2.msra.mxu0 0.0
        %479 = vmatprep.subr.mxu0 0.0
        %480 = vmatpush2.msra.mxu0 0.0
        %481 = vmatprep.subr.mxu0 0.0
        %482 = vmatpush2.msra.mxu0 0.0
        %483 = vmatprep.subr.mxu0 0.0
        %484 = vmatpush2.msra.mxu0 0.0
        %485 = vmatprep.subr.mxu0 0.0
        %486 = vmatpush2.msra.mxu0 0.0
        %487 = vmatprep.subr.mxu0 0.0
        %488 = vmatpush2.msra.mxu0 0.0
        %489 = vmatprep.subr.mxu0 0.0
        %490 = vmatpush2.msra.mxu0 0.0
        %491 = vmatprep.subr.mxu0 0.0
        %492 = vmatpush2.msra.mxu0 0.0
        %493 = vmatprep.mubr.f32.mxu0 0.0
        %494 = vmatmul.mubr.f32.gmra.mxu0 %v428
        %v495 = vpop.f32.mrf.mxu0
        %v496 = vadd.f32 %v266, %v495
        %v497 = vpop.f32.mrf.mxu0
        %498 = vdwg.mxu0
        %v499 = vmax.f32 %v496, 0.0
        %v500 = vmul.f32 %v499, %v343
        %v501 = vsel %vm346, %v500, 0.0
        %502 = vadd.xlane.f32.xlu0 %v501
        %v503 = vpop.xlane.xlu0 %502
        %s504 = scalar_lea.vmem %s220, 24 [#allocation2]
        %v505 = vld [vmem:[%s504] sm:$0xff]
        %506 = vmatprep.subr.mxu0 0.0
        %507 = vmatpush1.msra.mxu0 %v258
        %508 = vmatprep.subr.mxu0 0.0
        %509 = vmatpush1.msra.mxu0 %v257
        %510 = vmatprep.subr.mxu0 0.0
        %511 = vmatpush1.msra.mxu0 %v256
        %512 = vmatprep.subr.mxu0 0.0
        %513 = vmatpush1.msra.mxu0 %v255
        %514 = vmatprep.subr.mxu0 0.0
        %515 = vmatpush1.msra.mxu0 %v254
        %516 = vmatprep.subr.mxu0 0.0
        %517 = vmatpush1.msra.mxu0 %v253
        %518 = vmatprep.subr.mxu0 0.0
        %519 = vmatpush1.msra.mxu0 %v252
        %520 = vmatprep.subr.mxu0 0.0
        %521 = vmatpush1.msra.mxu0 %v251
        %522 = vmatprep.subr.mxu0 0.0
        %523 = vmatpush1.msra.mxu0 %v250
        %524 = vmatprep.subr.mxu0 0.0
        %525 = vmatpush1.msra.mxu0 %v249
        %526 = vmatprep.subr.mxu0 0.0
        %527 = vmatpush1.msra.mxu0 %v248
        %528 = vmatprep.subr.mxu0 0.0
        %529 = vmatpush1.msra.mxu0 %v247
        %530 = vmatprep.subr.mxu0 0.0
        %531 = vmatpush1.msra.mxu0 %v246
        %532 = vmatprep.subr.mxu0 0.0
        %533 = vmatpush1.msra.mxu0 %v245
        %534 = vmatprep.subr.mxu0 0.0
        %535 = vmatpush1.msra.mxu0 %v244
        %536 = vmatprep.subr.mxu0 0.0
        %537 = vmatpush1.msra.mxu0 %v243
        %538 = vmatprep.subr.mxu0 0.0
        %539 = vmatpush2.msra.mxu0 0.0
        %540 = vmatprep.subr.mxu0 0.0
        %541 = vmatpush2.msra.mxu0 0.0
        %542 = vmatprep.subr.mxu0 0.0
        %543 = vmatpush2.msra.mxu0 0.0
        %544 = vmatprep.subr.mxu0 0.0
        %545 = vmatpush2.msra.mxu0 0.0
        %546 = vmatprep.subr.mxu0 0.0
        %547 = vmatpush2.msra.mxu0 0.0
        %548 = vmatprep.subr.mxu0 0.0
        %549 = vmatpush2.msra.mxu0 0.0
        %550 = vmatprep.subr.mxu0 0.0
        %551 = vmatpush2.msra.mxu0 0.0
        %552 = vmatprep.subr.mxu0 0.0
        %553 = vmatpush2.msra.mxu0 0.0
        %554 = vmatprep.subr.mxu0 0.0
        %555 = vmatpush2.msra.mxu0 0.0
        %556 = vmatprep.subr.mxu0 0.0
        %557 = vmatpush2.msra.mxu0 0.0
        %558 = vmatprep.subr.mxu0 0.0
        %559 = vmatpush2.msra.mxu0 0.0
        %560 = vmatprep.subr.mxu0 0.0
        %561 = vmatpush2.msra.mxu0 0.0
        %562 = vmatprep.subr.mxu0 0.0
        %563 = vmatpush2.msra.mxu0 0.0
        %564 = vmatprep.subr.mxu0 0.0
        %565 = vmatpush2.msra.mxu0 0.0
        %566 = vmatprep.subr.mxu0 0.0
        %567 = vmatpush2.msra.mxu0 0.0
        %568 = vmatprep.subr.mxu0 0.0
        %569 = vmatpush2.msra.mxu0 0.0
        %570 = vmatprep.mubr.f32.mxu0 0.0
        %571 = vmatmul.mubr.f32.gmra.mxu0 %v505
        %v572 = vpop.f32.mrf.mxu0
        %v573 = vadd.f32 %v266, %v572
        %v574 = vpop.f32.mrf.mxu0
        %575 = vdwg.mxu0
        %v576 = vmax.f32 %v573, 0.0
        %v577 = vmul.f32 %v576, %v343
        %v578 = vsel %vm346, %v577, 0.0
        %579 = vadd.xlane.f32.xlu0 %v578
        %v580 = vpop.xlane.xlu0 %579
        %v581 = vmax.f32 %v349, %v426
        %v582 = vmax.f32 %v581, %v503
        %v583 = vmax.f32 %v582, %v580
        %v584 = vsub.f32 %v349, %v583
        %v585 = vmul.f32 %v584, 1.442695
        %v586 = vpow.pop %v585
        %v587 = vsub.f32 %v426, %v583
        %v588 = vmul.f32 %v587, 1.442695
        %v589 = vpow.pop %v588
        %v590 = vsub.f32 %v503, %v583
        %v591 = vmul.f32 %v590, 1.442695
        %v592 = vpow.pop %v591
        %v593 = vsub.f32 %v580, %v583
        %v594 = vmul.f32 %v593, 1.442695
        %v595 = vpow.pop %v594
        %v596 = vadd.f32 %v586, %v589
        %v597 = vadd.f32 %v596, %v592
        %v598 = vadd.f32 %v597, %v595
        %v599 = vrcp.pop %v598
        %v600 = vmul.f32 %v586, %v599
        %v601 = vmul.f32 %v600, %v261
        %v602 = vmul.f32 %v589, %v599
        %v603 = vmul.f32 %v602, %v351
        %v604 = vadd.f32 %v601, %v603
        %v605 = vmul.f32 %v592, %v599
        %v606 = vmul.f32 %v605, %v428
        %v607 = vadd.f32 %v604, %v606
        %v608 = vmul.f32 %v595, %v599
        %v609 = vmul.f32 %v608, %v505
        %v610 = vadd.f32 %v607, %v609
        %611 = vst [vmem:[%s242] sm:$0xff] %v610
        %s612 = sand.u32 %s115, 1
        %s613 = scalar_lea.sflag [#allocation4], %s612
        %s614 = sand.u32 %s115, 1
        %s615 = smul.addr %s614, 8
        %s616 = scalar_lea.vmem [#allocation3], %s615
        // Predicated region
        $region75: #{tpu_custom_call.1} parent=69 // pred_check
          %p617 = pneg %p125
        $region76: #{tpu_custom_call.1} parent=69 // pred_check_branch
          %619 = sbr.rel (%p617) target = $region78
        $region77: #{tpu_custom_call.1} parent=69 // pred_region
          %s621 = ssub.s32 128, 128
          %622 = vsyncadd %s613, %s621
          %s623 = smul.addr %s18, 128
          %s624 = scalar_lea.hbm %s4, %s623
          %s626 = sshll.u32 %s616, 4
          %s627 = int_to_ptr.vmem [resolvable:$true] %s626
          %629 = dma.vmem_to_hbm [thread:$0]  %s627, 128, %s624, %s613
        $region78: #{tpu_custom_call.1} parent=69 // pred_fallthru
          _
      $region70: #{tpu_custom_call.1} parent=5 // pred_fallthru
        _
      %p630 = scmp.le.s32.totalorder 2, %s13
      // Predicated region
      $region79: #{tpu_custom_call.1} parent=5 // pred_check
        %p631 = pneg %p630
      $region80: #{tpu_custom_call.1} parent=5 // pred_check_branch
        %633 = sbr.rel (%p631) target = $region82
      $region81: #{tpu_custom_call.1} parent=5 // pred_region
        %s634 = ssub.s32 %s13, 2
        // Predicated region
        $region83: #{tpu_custom_call.1} parent=81 // pred_check
          %p635 = pneg %p131
        $region84: #{tpu_custom_call.1} parent=81 // pred_check_branch
          %637 = sbr.rel (%p635) target = $region86
        $region85: #{tpu_custom_call.1} parent=81 // pred_region
          %s638 = sand.u32 %s116, 1
          %s639 = scalar_lea.sflag [#allocation4], %s638
          %s640 = sand.u32 %s116, 1
          %s641 = smul.addr %s640, 8
          %s642 = scalar_lea.vmem [#allocation3], %s641
          %643 = dma.done %s639, 128
        $region86: #{tpu_custom_call.1} parent=81 // pred_fallthru
          _
      $region82: #{tpu_custom_call.1} parent=5 // pred_fallthru
        _
    $region6: #{tpu_custom_call.1} parent=1 // loop_footer
      %s17 = sadd.s32 1, %s13
    $region7: #{tpu_custom_call.1} parent=1 // loop_footer_branch
      %12 = sbr.rel target = $region3
    $region8: #{tpu_custom_call.1} parent=1 // loop_exit
      _
    %644 = vsyncpa [#allocation4], 1
    %s645 = scalar_lea.sflag [#allocation4], 1
    %646 = vsyncpa %s645, 1

</llo_original>
